<compile_context>
chip_gen: v5e
topology: v5e:2x2
jax: 0.10.0
libtpu: 0.0.40
codegen_flags: <defaults>
</compile_context>

<pallas_src>
import jax
import jax.numpy as jnp
from jax.experimental import pallas as pl
from jax.experimental.pallas import tpu as pltpu


def _round_up(v, m):
    return (v + m - 1) // m * m


def _lane_pad(dim):
    # v6e/v7x MXUs are 2x256x256 -> prefer 256-wide tiles for larger dims; for small dims
    # stick to the minimal 128-lane requirement (less padding; v5e's 4x128x128 is matched).
    return _round_up(dim, 256) if dim > 128 else _round_up(dim, 128)


def _pick_tm(batch):
    """Batch tile: large (amortizes per-grid-step overhead and the MXU weight push), but
    shrinks so there are >= 2 batch tiles when possible (v7x megacore parallelism)."""
    if batch <= 8:
        return _round_up(max(batch, 1), 8)
    tm = 512
    while tm > 8 and _round_up(batch, tm) // tm < 2:
        tm //= 2
    return max(tm, 8)


def _const_spec(shape):
    # Weight/bias blocks are VMEM-resident (constant index_map). Request single-buffering
    # so Pallas doesn't double-buffer the largest operands (matters on v7x's 64 MiB VMEM).
    try:
        return pl.BlockSpec(shape, lambda i: (0, 0), pipeline_mode=pl.Buffered(1))
    except (TypeError, AttributeError):
        return pl.BlockSpec(shape, lambda i: (0, 0))


def fused_mlp_kernel(x_ref, w1t_ref, b1_ref, w2t_ref, b2_ref, o_ref):
    # x_ref:   (tm, K1)  bf16 batch tile
    # w1t_ref: (K1, H1)  bf16, VMEM-resident (pre-transposed to (in, out))
    # b1_ref:  (1,  H1)  f32
    # w2t_ref: (H1, H2)  bf16, VMEM-resident
    # b2_ref:  (1,  H2)  f32
    # o_ref:   (tm, H2)  f32
    # Layer 1: bf16 MXU inputs, f32 accumulate, f32 bias broadcast-add.
    h = jnp.dot(x_ref[...], w1t_ref[...],
                preferred_element_type=jnp.float32) + b1_ref[...]
    # Layer 2 fused in the same kernel: the intermediate h never leaves VMEM. Re-quantize
    # to bf16 so the second matmul also runs at MXU bf16 rate; accumulate in f32.
    y = jnp.dot(h.astype(jnp.bfloat16), w2t_ref[...],
                preferred_element_type=jnp.float32) + b2_ref[...]
    o_ref[...] = y.astype(o_ref.dtype)


def prepare_params(w1, b1, w2, b2):
    """One-time parameter prep (hoisted out of the per-call forward path): transpose the
    PyTorch (out, in) Linear weights to (in, out), zero-pad to lane/sublane-friendly
    shapes, and cast the matmul operands to bf16 (biases stay f32 for the f32 add)."""
    h1, in_f = w1.shape
    h2 = w2.shape[0]
    K1, H1, H2 = _lane_pad(in_f), _lane_pad(h1), _lane_pad(h2)
    w1tp = jnp.pad(w1.T.astype(jnp.bfloat16), ((0, K1 - in_f), (0, H1 - h1)))
    w2tp = jnp.pad(w2.T.astype(jnp.bfloat16), ((0, H1 - h1), (0, H2 - h2)))
    b1p = jnp.pad(b1.astype(jnp.float32), (0, H1 - h1)).reshape(1, H1)
    b2p = jnp.pad(b2.astype(jnp.float32), (0, H2 - h2)).reshape(1, H2)
    dims = dict(in_f=in_f, h1=h1, h2=h2, K1=K1, H1=H1, H2=H2)
    return (w1tp, b1p, w2tp, b2p), dims


def torch_model_forward(x, params, dims):
    """Forward of TorchModel: y = (x @ W1^T + b1) @ W2^T + b2.  x: (B, input_size) f32."""
    w1tp, b1p, w2tp, b2p = params
    in_f, h2 = dims["in_f"], dims["h2"]
    K1, H1, H2 = dims["K1"], dims["H1"], dims["H2"]
    B = x.shape[0]
    tm = _pick_tm(B)
    Bp = _round_up(B, tm)

    # bf16 MXU input; the only per-call HBM materialization is this padded x.
    xp = jnp.pad(x.astype(jnp.bfloat16), ((0, Bp - B), (0, K1 - in_f)))

    grid = (Bp // tm,)

    # VMEM budget from actual buffer sizes (+ headroom), capped at 48 MiB so it always
    # fits v7x's 64 MiB physical VMEM with room for Mosaic internal scratch.
    needed = (
        2 * tm * K1 * 2            # x tile, double-buffered, bf16
        + 2 * tm * H2 * 4          # out tile, double-buffered, f32
        + (K1 * H1 + H1 * H2) * 2  # resident bf16 weights (single-buffered)
        + (H1 + H2) * 4            # resident f32 biases
        + tm * H1 * 4              # intermediate h (f32)
    )
    vmem_limit = int(min(max(2 * needed, 16 * 1024 * 1024), 48 * 1024 * 1024))

    cost = pl.CostEstimate(
        flops=2 * Bp * (K1 * H1 + H1 * H2),
        transcendentals=0,
        bytes_accessed=(xp.size * 2 + w1tp.size * 2 + w2tp.size * 2
                        + b1p.size * 4 + b2p.size * 4 + Bp * H2 * 4),
    )

    out_padded = pl.pallas_call(
        fused_mlp_kernel,
        out_shape=jax.ShapeDtypeStruct((Bp, H2), jnp.float32),
        grid=grid,
        in_specs=[
            pl.BlockSpec((tm, K1), lambda i: (i, 0)),   # x: streamed over batch tiles
            _const_spec((K1, H1)),                      # W1^T: VMEM-resident
            _const_spec((1, H1)),                       # b1:   VMEM-resident
            _const_spec((H1, H2)),                      # W2^T: VMEM-resident
            _const_spec((1, H2)),                       # b2:   VMEM-resident
        ],
        out_specs=pl.BlockSpec((tm, H2), lambda i: (i, 0)),
        compiler_params=pltpu.CompilerParams(
            dimension_semantics=("parallel",),          # split batch tiles across TCs (v7x)
            vmem_limit_bytes=vmem_limit,
        ),
        cost_estimate=cost,
    )(xp, w1tp, b1p, w2tp, b2p)

    return out_padded[:B, :h2]


if __name__ == "__main__":
    input_size, hidden_size1, hidden_size2 = 3, 5, 2

    # Deterministic parameter init (PyTorch-Linear-like uniform scale).
    key = jax.random.PRNGKey(0)
    k1, k2, k3, k4 = jax.random.split(key, 4)
    lim1 = 1.0 / jnp.sqrt(input_size)
    lim2 = 1.0 / jnp.sqrt(hidden_size1)
    w1 = jax.random.uniform(k1, (hidden_size1, input_size), jnp.float32, -lim1, lim1)
    b1 = jax.random.uniform(k2, (hidden_size1,), jnp.float32, -lim1, lim1)
    w2 = jax.random.uniform(k3, (hidden_size2, hidden_size1), jnp.float32, -lim2, lim2)
    b2 = jax.random.uniform(k4, (hidden_size2,), jnp.float32, -lim2, lim2)

    # Example input matching the original script: batch=2, input_size=3.
    x = jnp.array([[3.1, 1.3, 1.2], [2.1, 1.3, 13.0]], dtype=jnp.float32)

    # One-time parameter prep (transpose + pad + bf16 cast), then the kernel call.
    # NOTE: at these toy shapes (3->5->2, batch 2) XLA's fused dot would beat a padded
    # Pallas kernel; we run the kernel anyway to exercise the TPU path.
    params, dims = prepare_params(w1, b1, w2, b2)
    y = torch_model_forward(x, params, dims)
    jax.block_until_ready(y)

    # Reference 1: bf16-input / f32-accumulate, matching the kernel's MXU precision.
    hb = jnp.dot(x.astype(jnp.bfloat16), w1.T.astype(jnp.bfloat16),
                 preferred_element_type=jnp.float32) + b1
    ref_bf16 = jnp.dot(hb.astype(jnp.bfloat16), w2.T.astype(jnp.bfloat16),
                       preferred_element_type=jnp.float32) + b2
    # Reference 2: full-f32 PyTorch semantics y = (x @ W1^T + b1) @ W2^T + b2.
    ref_f32 = (x @ w1.T + b1) @ w2.T + b2

    assert y.shape == (2, hidden_size2), y.shape
    assert jnp.allclose(y, ref_bf16, atol=1e-3, rtol=1e-3), (y, ref_bf16)
    assert jnp.allclose(y, ref_f32, atol=2.5e-1, rtol=5e-2), (y, ref_f32)
    print("KERNEL_OK")
</pallas_src>

<mosaic_0001>
module attributes {stable_mosaic.version = 11 : i64} {
  func.func @fused_mlp_kernel(%arg0: i32, %arg1: memref<8x128xbf16, #tpu.memory_space<vmem>>, %arg2: memref<128x128xbf16, #tpu.memory_space<vmem>>, %arg3: memref<1x128xf32, #tpu.memory_space<vmem>>, %arg4: memref<128x128xbf16, #tpu.memory_space<vmem>>, %arg5: memref<1x128xf32, #tpu.memory_space<vmem>>, %arg6: memref<8x128xf32, #tpu.memory_space<vmem>>) attributes {dimension_semantics = [#tpu.dimension_semantics<parallel>], iteration_bounds = array<i64: 1>, scalar_prefetch = 0 : i64, scratch_operands = 0 : i64, tpu.core_type = #tpu.core_type<tc>, window_params = [{transform_indices = @transform_0, window_bounds = array<i64: 8, 128>}, {pipeline_mode = #tpu.pipeline_mode<synchronous>, transform_indices = @transform_1, window_bounds = array<i64: 128, 128>}, {pipeline_mode = #tpu.pipeline_mode<synchronous>, transform_indices = @transform_2, window_bounds = array<i64: 1, 128>}, {pipeline_mode = #tpu.pipeline_mode<synchronous>, transform_indices = @transform_3, window_bounds = array<i64: 128, 128>}, {pipeline_mode = #tpu.pipeline_mode<synchronous>, transform_indices = @transform_4, window_bounds = array<i64: 1, 128>}, {transform_indices = @transform_5, window_bounds = array<i64: 8, 128>}]} {
    %c0 = arith.constant 0 : index
    %c0_0 = arith.constant 0 : index
    %0 = vector.load %arg1[%c0, %c0_0] : memref<8x128xbf16, #tpu.memory_space<vmem>>, vector<8x128xbf16>
    %c0_1 = arith.constant 0 : index
    %c0_2 = arith.constant 0 : index
    %1 = vector.load %arg2[%c0_1, %c0_2] : memref<128x128xbf16, #tpu.memory_space<vmem>>, vector<128x128xbf16>
    %cst = arith.constant dense<0.000000e+00> : vector<8x128xf32>
    %2 = tpu.matmul %0, %1, %cst {dimension_numbers = #tpu.dot_dimension_numbers<[1], [0], [0], [1], [0, 0, 1, 1], [], []>} : vector<8x128xbf16>, vector<128x128xbf16>, vector<8x128xf32> -> vector<8x128xf32>
    %c0_3 = arith.constant 0 : index
    %c0_4 = arith.constant 0 : index
    %3 = vector.load %arg3[%c0_3, %c0_4] : memref<1x128xf32, #tpu.memory_space<vmem>>, vector<1x128xf32>
    %4 = vector.broadcast %3 : vector<1x128xf32> to vector<8x128xf32>
    %5 = arith.addf %2, %4 : vector<8x128xf32>
    %6 = arith.truncf %5 : vector<8x128xf32> to vector<8x128xbf16>
    %c0_5 = arith.constant 0 : index
    %c0_6 = arith.constant 0 : index
    %7 = vector.load %arg4[%c0_5, %c0_6] : memref<128x128xbf16, #tpu.memory_space<vmem>>, vector<128x128xbf16>
    %cst_7 = arith.constant dense<0.000000e+00> : vector<8x128xf32>
    %8 = tpu.matmul %6, %7, %cst_7 {dimension_numbers = #tpu.dot_dimension_numbers<[1], [0], [0], [1], [0, 0, 1, 1], [], []>} : vector<8x128xbf16>, vector<128x128xbf16>, vector<8x128xf32> -> vector<8x128xf32>
    %c0_8 = arith.constant 0 : index
    %c0_9 = arith.constant 0 : index
    %9 = vector.load %arg5[%c0_8, %c0_9] : memref<1x128xf32, #tpu.memory_space<vmem>>, vector<1x128xf32>
    %10 = vector.broadcast %9 : vector<1x128xf32> to vector<8x128xf32>
    %11 = arith.addf %8, %10 : vector<8x128xf32>
    %c0_10 = arith.constant 0 : index
    %c0_11 = arith.constant 0 : index
    %12 = vector.load %arg6[%c0_10, %c0_11] : memref<8x128xf32, #tpu.memory_space<vmem>>, vector<8x128xf32>
    tpu.vector_store %arg6[%c0_10, %c0_11], %11 {strides = array<i32>} : memref<8x128xf32, #tpu.memory_space<vmem>>, vector<8x128xf32>,
    return
  }
  func.func @transform_0(%arg0: i32) -> (i32, i32) {
    %c0_i32 = arith.constant 0 : i32
    %c0_i32_0 = arith.constant 0 : i32
    return %arg0, %c0_i32 : i32, i32
  }
  func.func @transform_1(%arg0: i32) -> (i32, i32) {
    %c0_i32 = arith.constant 0 : i32
    %c0_i32_0 = arith.constant 0 : i32
    %c0_i32_1 = arith.constant 0 : i32
    return %c0_i32, %c0_i32_0 : i32, i32
  }
  func.func @transform_2(%arg0: i32) -> (i32, i32) {
    %c0_i32 = arith.constant 0 : i32
    %c0_i32_0 = arith.constant 0 : i32
    %c0_i32_1 = arith.constant 0 : i32
    return %c0_i32, %c0_i32_0 : i32, i32
  }
  func.func @transform_3(%arg0: i32) -> (i32, i32) {
    %c0_i32 = arith.constant 0 : i32
    %c0_i32_0 = arith.constant 0 : i32
    %c0_i32_1 = arith.constant 0 : i32
    return %c0_i32, %c0_i32_0 : i32, i32
  }
  func.func @transform_4(%arg0: i32) -> (i32, i32) {
    %c0_i32 = arith.constant 0 : i32
    %c0_i32_0 = arith.constant 0 : i32
    %c0_i32_1 = arith.constant 0 : i32
    return %c0_i32, %c0_i32_0 : i32, i32
  }
  func.func @transform_5(%arg0: i32) -> (i32, i32) {
    %c0_i32 = arith.constant 0 : i32
    %c0_i32_0 = arith.constant 0 : i32
    return %arg0, %c0_i32 : i32, i32
  }
}

</mosaic_0001>

<llo_original>
// kernel: tpu_custom_call.1
$region0: #{tpu_custom_call.1}
  #allocation0 [shape = 'u32[]', space=smem, size = 0x4, offset = 0x4, fixed_abs, tag = 'smem constant byte address 0x4 - core index']
  #allocation1 [shape = 'u32[72,128]{1,0:T(1,128)}', space=vmem, size = 0x9000, scoped, tag = 'internal scratch']
  %s0 = inlined_call_operand.hbm [shape: bf16[8,128], index: 0, kind: input, shape index: {}]
  %s1 = inlined_call_operand.hbm [shape: bf16[128,128], index: 1, kind: input, shape index: {}]
  %s2 = inlined_call_operand.vmem [shape: f32[1,128], index: 2, kind: input, shape index: {}]
  %s3 = inlined_call_operand.hbm [shape: bf16[128,128], index: 3, kind: input, shape index: {}]
  %s4 = inlined_call_operand.vmem [shape: f32[1,128], index: 4, kind: input, shape index: {}]
  %s5 = inlined_call_operand.hbm [shape: f32[8,128], index: 5, kind: output, shape index: {}]
  %s6 = sld [smem:[#allocation0]]
  $region42: #{tpu_custom_call.1} parent=0
    _
  %s8 = ssub.s32 1, %s6
  %s9 = scalar_select 0, %s8, %s6
  $region1: #{tpu_custom_call.1} parent=0
    #allocation2 [shape = 'u8[2048]{0}', space=vmem, size = 0x800, scoped, tag = 'input window, operand 0, single buffered']
    #allocation3 [shape = 's32[1]{0}', space=sflag, size = 0x4, scoped, tag = 'scoped memory for tpu_custom_call.1']
    #allocation4 [shape = 's32[1]{0}', space=sflag, size = 0x4, scoped, tag = 'scoped memory for tpu_custom_call.1']
    #allocation5 [shape = 'u8[32768]{0}', space=vmem, size = 0x8000, scoped, tag = 'input window, operand 1, single buffered']
    #allocation6 [shape = 's32[1]{0}', space=sflag, size = 0x4, scoped, tag = 'scoped memory for tpu_custom_call.1']
    #allocation7 [shape = 'u8[32768]{0}', space=vmem, size = 0x8000, scoped, tag = 'input window, operand 3, single buffered']
    #allocation8 [shape = 'u8[4096]{0}', space=vmem, size = 0x1000, scoped, tag = 'output window, operand 0, single buffered']
    %10 = vsyncpa [#allocation3], 0
    %11 = vsyncpa [#allocation6], 0
    %12 = vsyncpa [#allocation4], 0
    // Predicated region
    $region2: #{tpu_custom_call.1} parent=1 // pred_check
      _
    $region3: #{tpu_custom_call.1} parent=1 // pred_check_branch
      %14 = sbr.rel (0) target = $region5
    $region4: #{tpu_custom_call.1} parent=1 // pred_region
      %16 = vsyncadd [#allocation3], 0
      %s18 = sshll.u32 %s0, 4
      %s19 = int_to_ptr.hbm [resolvable:$true] %s18
      %s20 = sshll.u32 [#allocation2], 4
      %s21 = int_to_ptr.vmem [resolvable:$true] %s20
      %23 = dma.hbm_to_vmem [thread:$0]  %s19, 64, %s21, [#allocation3]
    $region5: #{tpu_custom_call.1} parent=1 // pred_fallthru
      _
    // Predicated region
    $region6: #{tpu_custom_call.1} parent=1 // pred_check
      _
    $region7: #{tpu_custom_call.1} parent=1 // pred_check_branch
      %25 = sbr.rel (0) target = $region9
    $region8: #{tpu_custom_call.1} parent=1 // pred_region
      %27 = vsyncadd [#allocation6], 0
      %s28 = sshll.u32 %s1, 4
      %s29 = int_to_ptr.hbm [resolvable:$true] %s28
      %s30 = sshll.u32 [#allocation5], 4
      %s31 = int_to_ptr.vmem [resolvable:$true] %s30
      %36 = dma.hbm_to_vmem [thread:$0]  %s29, 1024, %s31, [#allocation6], 64, 64, 4
    $region9: #{tpu_custom_call.1} parent=1 // pred_fallthru
      _
    // Predicated region
    $region10: #{tpu_custom_call.1} parent=1 // pred_check
      _
    $region11: #{tpu_custom_call.1} parent=1 // pred_check_branch
      %38 = sbr.rel (0) target = $region13
    $region12: #{tpu_custom_call.1} parent=1 // pred_region
      _
    $region13: #{tpu_custom_call.1} parent=1 // pred_fallthru
      _
    // Predicated region
    $region14: #{tpu_custom_call.1} parent=1 // pred_check
      _
    $region15: #{tpu_custom_call.1} parent=1 // pred_check_branch
      %40 = sbr.rel (0) target = $region17
    $region16: #{tpu_custom_call.1} parent=1 // pred_region
      %42 = vsyncadd [#allocation6], 0
      %s43 = sshll.u32 %s3, 4
      %s44 = int_to_ptr.hbm [resolvable:$true] %s43
      %s45 = sshll.u32 [#allocation7], 4
      %s46 = int_to_ptr.vmem [resolvable:$true] %s45
      %51 = dma.hbm_to_vmem [thread:$0]  %s44, 1024, %s46, [#allocation6], 64, 64, 4
    $region17: #{tpu_custom_call.1} parent=1 // pred_fallthru
      _
    // Predicated region
    $region18: #{tpu_custom_call.1} parent=1 // pred_check
      _
    $region19: #{tpu_custom_call.1} parent=1 // pred_check_branch
      %53 = sbr.rel (0) target = $region21
    $region20: #{tpu_custom_call.1} parent=1 // pred_region
      _
    $region21: #{tpu_custom_call.1} parent=1 // pred_fallthru
      _
    // Predicated region
    $region22: #{tpu_custom_call.1} parent=1 // pred_check
      _
    $region23: #{tpu_custom_call.1} parent=1 // pred_check_branch
      %55 = sbr.rel (0) target = $region25
    $region24: #{tpu_custom_call.1} parent=1 // pred_region
      %57 = dma.done [#allocation3], 64
    $region25: #{tpu_custom_call.1} parent=1 // pred_fallthru
      _
    // Predicated region
    $region26: #{tpu_custom_call.1} parent=1 // pred_check
      _
    $region27: #{tpu_custom_call.1} parent=1 // pred_check_branch
      %59 = sbr.rel (0) target = $region29
    $region28: #{tpu_custom_call.1} parent=1 // pred_region
      %61 = dma.done [#allocation6], 1024
    $region29: #{tpu_custom_call.1} parent=1 // pred_fallthru
      _
    // Predicated region
    $region30: #{tpu_custom_call.1} parent=1 // pred_check
      _
    $region31: #{tpu_custom_call.1} parent=1 // pred_check_branch
      %63 = sbr.rel (0) target = $region33
    $region32: #{tpu_custom_call.1} parent=1 // pred_region
      %65 = dma.done [#allocation6], 1024
    $region33: #{tpu_custom_call.1} parent=1 // pred_fallthru
      _
    %v66 = vld [vmem:[#allocation2] sm:$0xf]
    %v67 = vld [vmem:[#allocation5] sm:$0xf]
    %v68 = vld [vmem:[#allocation5 + $0x4] sm:$0xf]
    %v69 = vld [vmem:[#allocation5 + $0x8] sm:$0xf]
    %v70 = vld [vmem:[#allocation5 + $0xc] sm:$0xf]
    %v71 = vld [vmem:[#allocation5 + $0x10] sm:$0xf]
    %v72 = vld [vmem:[#allocation5 + $0x14] sm:$0xf]
    %v73 = vld [vmem:[#allocation5 + $0x18] sm:$0xf]
    %v74 = vld [vmem:[#allocation5 + $0x1c] sm:$0xf]
    %v75 = vld [vmem:[#allocation5 + $0x20] sm:$0xf]
    %v76 = vld [vmem:[#allocation5 + $0x24] sm:$0xf]
    %v77 = vld [vmem:[#allocation5 + $0x28] sm:$0xf]
    %v78 = vld [vmem:[#allocation5 + $0x2c] sm:$0xf]
    %v79 = vld [vmem:[#allocation5 + $0x30] sm:$0xf]
    %v80 = vld [vmem:[#allocation5 + $0x34] sm:$0xf]
    %v81 = vld [vmem:[#allocation5 + $0x38] sm:$0xf]
    %v82 = vld [vmem:[#allocation5 + $0x3c] sm:$0xf]
    %v83 = vld [vmem:[%s2] sm:$0x1]
    %v85 = vperm.slane %v83, 0
    %v103 = vunpack.c.l.b16 %v67
    %v104 = vunpack.c.l.b16 %v68
    %v105 = vunpack.c.l.b16 %v69
    %v106 = vunpack.c.l.b16 %v70
    %v107 = vunpack.c.l.b16 %v71
    %v108 = vunpack.c.l.b16 %v72
    %v109 = vunpack.c.l.b16 %v73
    %v110 = vunpack.c.l.b16 %v74
    %v111 = vunpack.c.l.b16 %v75
    %v112 = vunpack.c.l.b16 %v76
    %v113 = vunpack.c.l.b16 %v77
    %v114 = vunpack.c.l.b16 %v78
    %v115 = vunpack.c.l.b16 %v79
    %v116 = vunpack.c.l.b16 %v80
    %v117 = vunpack.c.l.b16 %v81
    %v118 = vunpack.c.l.b16 %v82
    %v119 = vpack.c.b16 %v104, %v103
    %v120 = vpack.c.b16 %v106, %v105
    %v121 = vpack.c.b16 %v108, %v107
    %v122 = vpack.c.b16 %v110, %v109
    %v123 = vpack.c.b16 %v112, %v111
    %v124 = vpack.c.b16 %v114, %v113
    %v125 = vpack.c.b16 %v116, %v115
    %v126 = vpack.c.b16 %v118, %v117
    %135 = vmatpush.bf16.msra.mxu0 %v126
    %136 = vmatpush.bf16.msra.mxu0 %v125
    %137 = vmatpush.bf16.msra.mxu0 %v124
    %138 = vmatpush.bf16.msra.mxu0 %v123
    %139 = vmatpush.bf16.msra.mxu0 %v122
    %140 = vmatpush.bf16.msra.mxu0 %v121
    %141 = vmatpush.bf16.msra.mxu0 %v120
    %142 = vmatpush.bf16.msra.mxu0 %v119
    %143 = vmatmul.bf16.gmra.mxu0 %v66
    %v144 = vpop.f32.mrf.mxu0
    %v145 = vadd.f32 %v85, %v144
    %v146 = vpop.f32.mrf.mxu0
    %147 = vdwg.mxu0
    %v148 = vpack.c.bf16 %v145, %v145
    %v149 = vld [vmem:[#allocation7] sm:$0xf]
    %v150 = vld [vmem:[#allocation7 + $0x4] sm:$0xf]
    %v151 = vld [vmem:[#allocation7 + $0x8] sm:$0xf]
    %v152 = vld [vmem:[#allocation7 + $0xc] sm:$0xf]
    %v153 = vld [vmem:[#allocation7 + $0x10] sm:$0xf]
    %v154 = vld [vmem:[#allocation7 + $0x14] sm:$0xf]
    %v155 = vld [vmem:[#allocation7 + $0x18] sm:$0xf]
    %v156 = vld [vmem:[#allocation7 + $0x1c] sm:$0xf]
    %v157 = vld [vmem:[#allocation7 + $0x20] sm:$0xf]
    %v158 = vld [vmem:[#allocation7 + $0x24] sm:$0xf]
    %v159 = vld [vmem:[#allocation7 + $0x28] sm:$0xf]
    %v160 = vld [vmem:[#allocation7 + $0x2c] sm:$0xf]
    %v161 = vld [vmem:[#allocation7 + $0x30] sm:$0xf]
    %v162 = vld [vmem:[#allocation7 + $0x34] sm:$0xf]
    %v163 = vld [vmem:[#allocation7 + $0x38] sm:$0xf]
    %v164 = vld [vmem:[#allocation7 + $0x3c] sm:$0xf]
    %v165 = vld [vmem:[%s4] sm:$0x1]
    %v167 = vperm.slane %v165, 0
    %v185 = vunpack.c.l.b16 %v149
    %v186 = vunpack.c.l.b16 %v150
    %v187 = vunpack.c.l.b16 %v151
    %v188 = vunpack.c.l.b16 %v152
    %v189 = vunpack.c.l.b16 %v153
    %v190 = vunpack.c.l.b16 %v154
    %v191 = vunpack.c.l.b16 %v155
    %v192 = vunpack.c.l.b16 %v156
    %v193 = vunpack.c.l.b16 %v157
    %v194 = vunpack.c.l.b16 %v158
    %v195 = vunpack.c.l.b16 %v159
    %v196 = vunpack.c.l.b16 %v160
    %v197 = vunpack.c.l.b16 %v161
    %v198 = vunpack.c.l.b16 %v162
    %v199 = vunpack.c.l.b16 %v163
    %v200 = vunpack.c.l.b16 %v164
    %v201 = vpack.c.b16 %v186, %v185
    %v202 = vpack.c.b16 %v188, %v187
    %v203 = vpack.c.b16 %v190, %v189
    %v204 = vpack.c.b16 %v192, %v191
    %v205 = vpack.c.b16 %v194, %v193
    %v206 = vpack.c.b16 %v196, %v195
    %v207 = vpack.c.b16 %v198, %v197
    %v208 = vpack.c.b16 %v200, %v199
    %217 = vmatpush.bf16.msra.mxu0 %v208
    %218 = vmatpush.bf16.msra.mxu0 %v207
    %219 = vmatpush.bf16.msra.mxu0 %v206
    %220 = vmatpush.bf16.msra.mxu0 %v205
    %221 = vmatpush.bf16.msra.mxu0 %v204
    %222 = vmatpush.bf16.msra.mxu0 %v203
    %223 = vmatpush.bf16.msra.mxu0 %v202
    %224 = vmatpush.bf16.msra.mxu0 %v201
    %225 = vmatmul.bf16.gmra.mxu0 %v148
    %v226 = vpop.f32.mrf.mxu0
    %v227 = vadd.f32 %v167, %v226
    %v228 = vpop.f32.mrf.mxu0
    %229 = vdwg.mxu0
    %230 = vst [vmem:[#allocation8] sm:$0xff] %v227
    // Predicated region
    $region34: #{tpu_custom_call.1} parent=1 // pred_check
      _
    $region35: #{tpu_custom_call.1} parent=1 // pred_check_branch
      %232 = sbr.rel (0) target = $region37
    $region36: #{tpu_custom_call.1} parent=1 // pred_region
      %234 = vsyncadd [#allocation4], 0
      %s236 = sshll.u32 [#allocation8], 4
      %s237 = int_to_ptr.vmem [resolvable:$true] %s236
      %s238 = sshll.u32 %s5, 4
      %s239 = int_to_ptr.hbm [resolvable:$true] %s238
      %241 = dma.vmem_to_hbm [thread:$0]  %s237, 128, %s239, [#allocation4]
    $region37: #{tpu_custom_call.1} parent=1 // pred_fallthru
      _
    // Predicated region
    $region38: #{tpu_custom_call.1} parent=1 // pred_check
      _
    $region39: #{tpu_custom_call.1} parent=1 // pred_check_branch
      %243 = sbr.rel (0) target = $region41
    $region40: #{tpu_custom_call.1} parent=1 // pred_region
      %245 = dma.done [#allocation4], 128
    $region41: #{tpu_custom_call.1} parent=1 // pred_fallthru
      _
    %246 = vsyncpa [#allocation3], 1
    %247 = vsyncpa [#allocation6], 1
    %248 = vsyncpa [#allocation4], 1

</llo_original>
